<compile_context>
chip_gen: v6e
topology: v6e:2x2x1
jax: 0.10.0
libtpu: 0.0.40
codegen_flags: <defaults>
</compile_context>

<pallas_src>
import functools

import jax
import jax.numpy as jnp
from jax.experimental import pallas as pl
from jax.experimental.pallas import tpu as pltpu

LEAKY_SLOPE = 0.01   # nn.LeakyReLU default negative_slope
BN_EPS = 1e-5        # nn.BatchNorm1d default eps
HIDDEN = 128         # fc1 output width
DEFAULT_TILE_B = 8192
MAX_TILE_B = 16384   # keeps the VMEM request well under v7x's 64 MiB


def _round_up(n, m):
    return ((n + m - 1) // m) * m


def churn_kernel(x_ref, w1_ref, b1_ref, w3_ref, b3_ref, out_ref, *, mxu_dtype):
    # fc1 (+ folded bn1): cast MXU operands to mxu_dtype (bf16 by default) for
    # single-pass vmatmul; accumulate in f32.
    h = jnp.dot(x_ref[...].astype(mxu_dtype), w1_ref[...],
                preferred_element_type=jnp.float32)
    h = h + b1_ref[...]

    # LeakyReLU (VPU).  Dropout(p=0.3) -> identity in inference mode.
    h = jnp.where(h > 0, h, LEAKY_SLOPE * h)

    # fc3: contract the hidden dim of h (TILE_B, 128) against w3 (1, 128) with
    # the batch dim landing on lanes -> lane-dense (1, TILE_B) output row
    # (avoids a (TILE_B, 1) masked-store column + XLU transpose).
    row = jax.lax.dot_general(
        w3_ref[...], h.astype(mxu_dtype),
        dimension_numbers=(((1,), (1,)), ((), ())),
        preferred_element_type=jnp.float32)

    # b3 is a scalar living in SMEM.
    out_ref[...] = (row + b3_ref[0, 0]).astype(out_ref.dtype)


def _fold_bn_into_fc1(params):
    """Fold inference-mode BatchNorm1d (and fc1 bias) into fc1 weight/bias."""
    inv = params["gamma1"] * jax.lax.rsqrt(params["var1"] + BN_EPS)      # (1, 128)
    w1f = params["w1"] * inv                                             # (D_in, 128)
    b1f = (params["b1"] - params["mean1"]) * inv + params["beta1"]       # (1, 128)
    return w1f, b1f


def churn_forward(x, params, *, tile_b=None, mxu_dtype=jnp.bfloat16):
    """Inference forward.  x: (B, D_in) float32.  Returns (B, 1) float32.

    mxu_dtype controls the in-kernel cast of the matmul operands (bf16 gives
    the single-pass MXU rate on all TPU generations; accumulation stays f32).
    """
    B, d_in = x.shape
    w1f, b1f = _fold_bn_into_fc1(params)

    # Tile selection: big tiles (multiple of 128) so DMA, not per-step
    # overhead, dominates; keep >= 2 tiles when B is big enough so the
    # "parallel" batch axis can feed both TensorCores on v7x.
    if tile_b is None:
        tile_b = DEFAULT_TILE_B
        if B > 256:
            tile_b = min(tile_b, _round_up(pl.cdiv(B, 2), 128))
    tile_b = max(128, min(_round_up(tile_b, 128), MAX_TILE_B, _round_up(B, 128)))
    grid = pl.cdiv(B, tile_b)   # ragged last block; no host-side padding of x

    # Weights: tiny one-time casts on the wrapper side.  x stays f32 in HBM
    # (no wrapper-side astype pass); the bf16 cast happens in-kernel.
    w1 = w1f.astype(mxu_dtype)                       # (D_in, 128)
    b1 = b1f.astype(jnp.float32)                     # (1, 128)
    w3 = params["w3"].astype(mxu_dtype)              # (1, 128)
    b3 = params["b3"].astype(jnp.float32)            # (1, 1) -> SMEM scalar

    w_itemsize = jnp.dtype(mxu_dtype).itemsize
    x_tile_bytes = tile_b * d_in * x.dtype.itemsize
    out_tile_bytes = tile_b * 4
    param_bytes = w1.size * w_itemsize + w3.size * w_itemsize + b1.size * 4
    h_bytes = tile_b * HIDDEN * 4
    vmem_limit = int(2 * (x_tile_bytes + out_tile_bytes + param_bytes)
                     + 4 * h_bytes + (8 << 20))
    vmem_limit = min(vmem_limit, 48 << 20)   # stay under v7x's 64 MiB physical VMEM

    cost = pl.CostEstimate(
        flops=2 * B * d_in * HIDDEN + 2 * B * HIDDEN,
        transcendentals=0,
        bytes_accessed=int(B * d_in * x.dtype.itemsize + param_bytes + B * 4),
    )

    out = pl.pallas_call(
        functools.partial(churn_kernel, mxu_dtype=mxu_dtype),
        out_shape=jax.ShapeDtypeStruct((1, B), jnp.float32),
        grid=(grid,),
        in_specs=[
            pl.BlockSpec((tile_b, d_in), lambda i: (i, 0)),          # x tile
            pl.BlockSpec((d_in, HIDDEN), lambda i: (0, 0)),          # folded w1
            pl.BlockSpec((1, HIDDEN), lambda i: (0, 0)),             # folded b1
            pl.BlockSpec((1, HIDDEN), lambda i: (0, 0)),             # w3 row
            pl.BlockSpec(memory_space=pltpu.MemorySpace.SMEM),       # b3 scalar
        ],
        out_specs=pl.BlockSpec((1, tile_b), lambda i: (0, i)),
        compiler_params=pltpu.CompilerParams(
            dimension_semantics=("parallel",),
            vmem_limit_bytes=vmem_limit),
        cost_estimate=cost,
    )(x, w1, b1, w3, b3)

    # Rows beyond B in the ragged last block are garbage and discarded here.
    return out[0, :B].reshape(B, 1)


def init_params(key, input_dim):
    k1, k2, k3, k4, k5, k6 = jax.random.split(key, 6)
    return {
        # fc1: Linear(input_dim, 128); stored transposed (in, out)
        "w1": jax.random.normal(k1, (input_dim, HIDDEN), jnp.float32) * 0.05,
        "b1": jax.random.normal(k2, (1, HIDDEN), jnp.float32) * 0.05,
        # bn1: BatchNorm1d(128) affine params + running stats
        "gamma1": jnp.ones((1, HIDDEN), jnp.float32)
                  + 0.1 * jax.random.normal(k3, (1, HIDDEN), jnp.float32),
        "beta1": 0.1 * jax.random.normal(k4, (1, HIDDEN), jnp.float32),
        "mean1": 0.1 * jax.random.normal(k5, (1, HIDDEN), jnp.float32),
        "var1": jnp.ones((1, HIDDEN), jnp.float32),
        # fc3: Linear(128, 1); PyTorch layout (out_features, in_features)
        "w3": jax.random.normal(k6, (1, HIDDEN), jnp.float32) * 0.05,
        "b3": jnp.zeros((1, 1), jnp.float32),
    }


def reference_forward(x, p):
    h = x @ p["w1"] + p["b1"]
    h = (h - p["mean1"]) * (p["gamma1"] * jax.lax.rsqrt(p["var1"] + BN_EPS)) + p["beta1"]
    h = jnp.where(h > 0, h, LEAKY_SLOPE * h)
    return h @ p["w3"].T + p["b3"]


if __name__ == "__main__":
    key = jax.random.PRNGKey(0)
    kx, kp, kx2 = jax.random.split(key, 3)

    input_dim = 32
    params = init_params(kp, input_dim)

    # bf16 MXU operands vs f32 reference -> loosened tolerance (per review).
    TOL = dict(atol=2e-2, rtol=2e-2)

    # Small batch: single ragged tile (8 valid rows inside a 128-row block).
    x = jax.random.normal(kx, (8, input_dim), jnp.float32)
    out = jax.block_until_ready(churn_forward(x, params))
    ref = reference_forward(x, params)
    assert out.shape == (8, 1), out.shape
    assert jnp.allclose(out, ref, **TOL), (out, ref)

    # Ragged batch, auto tile: 2 tiles of 256 rows, last block partially valid.
    x2 = jax.random.normal(kx2, (300, input_dim), jnp.float32)
    out2 = jax.block_until_ready(churn_forward(x2, params))
    ref2 = reference_forward(x2, params)
    assert out2.shape == (300, 1), out2.shape
    assert jnp.allclose(out2, ref2, **TOL), (out2, ref2)

    # Explicit small tile -> 3-step grid, exercising multi-step pipelining.
    out3 = jax.block_until_ready(churn_forward(x2, params, tile_b=128))
    assert out3.shape == (300, 1), out3.shape
    assert jnp.allclose(out3, ref2, **TOL), (out3, ref2)

    print("KERNEL_OK")
</pallas_src>

<mosaic_0001>
module attributes {stable_mosaic.version = 11 : i64} {
  func.func @churn_kernel(%arg0: i32, %arg1: memref<128x32xf32, #tpu.memory_space<vmem>>, %arg2: memref<32x128xbf16, #tpu.memory_space<vmem>>, %arg3: memref<1x128xf32, #tpu.memory_space<vmem>>, %arg4: memref<1x128xbf16, #tpu.memory_space<vmem>>, %arg5: memref<1x1xf32, #tpu.memory_space<smem>>, %arg6: memref<1x128xf32, #tpu.memory_space<vmem>>) attributes {dimension_semantics = [#tpu.dimension_semantics<parallel>], iteration_bounds = array<i64: 1>, scalar_prefetch = 0 : i64, scratch_operands = 0 : i64, tpu.core_type = #tpu.core_type<tc>, window_params = [{transform_indices = @transform_0, window_bounds = array<i64: 128, 32>}, {pipeline_mode = #tpu.pipeline_mode<synchronous>, transform_indices = @transform_1, window_bounds = array<i64: 32, 128>}, {pipeline_mode = #tpu.pipeline_mode<synchronous>, transform_indices = @transform_2, window_bounds = array<i64: 1, 128>}, {pipeline_mode = #tpu.pipeline_mode<synchronous>, transform_indices = @transform_3, window_bounds = array<i64: 1, 128>}, {transform_indices = @transform_4, window_bounds = array<i64: 1, 1>}, {transform_indices = @transform_5, window_bounds = array<i64: 1, 128>}]} {
    %c0 = arith.constant 0 : index
    %c0_0 = arith.constant 0 : index
    %0 = vector.load %arg1[%c0, %c0_0] : memref<128x32xf32, #tpu.memory_space<vmem>>, vector<128x32xf32>
    %1 = arith.truncf %0 : vector<128x32xf32> to vector<128x32xbf16>
    %c0_1 = arith.constant 0 : index
    %c0_2 = arith.constant 0 : index
    %2 = vector.load %arg2[%c0_1, %c0_2] : memref<32x128xbf16, #tpu.memory_space<vmem>>, vector<32x128xbf16>
    %cst = arith.constant dense<0.000000e+00> : vector<128x128xf32>
    %3 = tpu.matmul %1, %2, %cst {dimension_numbers = #tpu.dot_dimension_numbers<[1], [0], [0], [1], [0, 0, 1, 1], [], []>} : vector<128x32xbf16>, vector<32x128xbf16>, vector<128x128xf32> -> vector<128x128xf32>
    %c0_3 = arith.constant 0 : index
    %c0_4 = arith.constant 0 : index
    %4 = vector.load %arg3[%c0_3, %c0_4] : memref<1x128xf32, #tpu.memory_space<vmem>>, vector<1x128xf32>
    %5 = vector.broadcast %4 : vector<1x128xf32> to vector<128x128xf32>
    %6 = arith.addf %3, %5 : vector<128x128xf32>
    %cst_5 = arith.constant 0.000000e+00 : f32
    %7 = vector.broadcast %cst_5 : f32 to vector<128x128xf32>
    %8 = arith.cmpf ogt, %6, %7 : vector<128x128xf32>
    %cst_6 = arith.constant 0.00999999977 : f32
    %9 = vector.broadcast %cst_6 : f32 to vector<128x128xf32>
    %10 = arith.mulf %9, %6 : vector<128x128xf32>
    %11 = arith.select %8, %6, %10 : vector<128x128xi1>, vector<128x128xf32>
    %c0_7 = arith.constant 0 : index
    %c0_8 = arith.constant 0 : index
    %12 = vector.load %arg4[%c0_7, %c0_8] : memref<1x128xbf16, #tpu.memory_space<vmem>>, vector<1x128xbf16>
    %13 = arith.truncf %11 : vector<128x128xf32> to vector<128x128xbf16>
    %cst_9 = arith.constant dense<0.000000e+00> : vector<1x128xf32>
    %14 = tpu.matmul %12, %13, %cst_9 {dimension_numbers = #tpu.dot_dimension_numbers<[1], [1], [0], [0], [0, 0, 1, 0], [], []>} : vector<1x128xbf16>, vector<128x128xbf16>, vector<1x128xf32> -> vector<1x128xf32>
    %c0_10 = arith.constant 0 : index
    %c0_11 = arith.constant 0 : index
    %15 = memref.load %arg5[%c0_10, %c0_11] : memref<1x1xf32, #tpu.memory_space<smem>>
    %16 = vector.broadcast %15 : f32 to vector<1x128xf32>
    %17 = arith.addf %14, %16 : vector<1x128xf32>
    %c0_12 = arith.constant 0 : index
    %c0_13 = arith.constant 0 : index
    %18 = vector.load %arg6[%c0_12, %c0_13] : memref<1x128xf32, #tpu.memory_space<vmem>>, vector<1x128xf32>
    tpu.vector_store %arg6[%c0_12, %c0_13], %17 {strides = array<i32>} : memref<1x128xf32, #tpu.memory_space<vmem>>, vector<1x128xf32>,
    return
  }
  func.func @transform_0(%arg0: i32) -> (i32, i32) {
    %c0_i32 = arith.constant 0 : i32
    %c0_i32_0 = arith.constant 0 : i32
    return %arg0, %c0_i32 : i32, i32
  }
  func.func @transform_1(%arg0: i32) -> (i32, i32) {
    %c0_i32 = arith.constant 0 : i32
    %c0_i32_0 = arith.constant 0 : i32
    %c0_i32_1 = arith.constant 0 : i32
    return %c0_i32, %c0_i32_0 : i32, i32
  }
  func.func @transform_2(%arg0: i32) -> (i32, i32) {
    %c0_i32 = arith.constant 0 : i32
    %c0_i32_0 = arith.constant 0 : i32
    %c0_i32_1 = arith.constant 0 : i32
    return %c0_i32, %c0_i32_0 : i32, i32
  }
  func.func @transform_3(%arg0: i32) -> (i32, i32) {
    %c0_i32 = arith.constant 0 : i32
    %c0_i32_0 = arith.constant 0 : i32
    %c0_i32_1 = arith.constant 0 : i32
    return %c0_i32, %c0_i32_0 : i32, i32
  }
  func.func @transform_4(%arg0: i32) -> (i32, i32) {
    %c0_i32 = arith.constant 0 : i32
    %c0_i32_0 = arith.constant 0 : i32
    %c0_i32_1 = arith.constant 0 : i32
    return %c0_i32, %c0_i32_0 : i32, i32
  }
  func.func @transform_5(%arg0: i32) -> (i32, i32) {
    %c0_i32 = arith.constant 0 : i32
    %c0_i32_0 = arith.constant 0 : i32
    return %c0_i32, %arg0 : i32, i32
  }
}

</mosaic_0001>

<llo_original>
// kernel: tpu_custom_call.1
$region0: #{tpu_custom_call.1}
  #allocation0 [shape = 'u32[]', space=smem, size = 0x4, offset = 0x4, fixed_abs, tag = 'smem constant byte address 0x4 - core index']
  #allocation1 [shape = 'u32[144,128]{1,0:T(1,128)}', space=vmem, size = 0x12000, scoped, tag = 'internal scratch']
  #allocation2 [shape = 'f32[1,1]{1,0:T(1,128)S(6)}', space=smem, size = 0x200, scoped, tag = 'scoped memory for tpu_custom_call.1']
  %s0 = inlined_call_operand.hbm [shape: f32[8,32], index: 0, kind: input, shape index: {}]
  %s1 = inlined_call_operand.hbm [shape: bf16[32,128], index: 1, kind: input, shape index: {}]
  %s2 = inlined_call_operand.vmem [shape: f32[1,128], index: 2, kind: input, shape index: {}]
  %s3 = inlined_call_operand.vmem [shape: bf16[1,128], index: 3, kind: input, shape index: {}]
  %s4 = inlined_call_operand.<no memory space> [shape: f32[1,1], index: 4, kind: input, shape index: {}]
  %s5 = inlined_call_operand.hbm [shape: f32[1,8], index: 5, kind: output, shape index: {}]
  %s6 = sld [smem:[#allocation0]]
  $region38: #{tpu_custom_call.1} parent=0
    _
  %s8 = ssub.s32 1, %s6
  %s9 = scalar_select 0, %s8, %s6
  %10 = sst [smem:[#allocation2]] %s4
  $region1: #{tpu_custom_call.1} parent=0
    #allocation3 [shape = 'u8[65536]{0}', space=vmem, size = 0x10000, scoped, tag = 'input window, operand 0, single buffered']
    #allocation4 [shape = 's32[1]{0}', space=sflag, size = 0x4, scoped, tag = 'scoped memory for tpu_custom_call.1']
    #allocation5 [shape = 's32[1]{0}', space=sflag, size = 0x4, scoped, tag = 'scoped memory for tpu_custom_call.1']
    #allocation6 [shape = 'u8[8192]{0}', space=vmem, size = 0x2000, scoped, tag = 'input window, operand 1, single buffered']
    #allocation7 [shape = 's32[1]{0}', space=sflag, size = 0x4, scoped, tag = 'scoped memory for tpu_custom_call.1']
    #allocation8 [shape = 'u8[512]{0}', space=vmem, size = 0x400, scoped, tag = 'output window, operand 0, single buffered']
    %11 = vsyncpa [#allocation4], 0
    %12 = vsyncpa [#allocation7], 0
    %13 = vsyncpa [#allocation5], 0
    // Predicated region
    $region2: #{tpu_custom_call.1} parent=1 // pred_check
      _
    $region3: #{tpu_custom_call.1} parent=1 // pred_check_branch
      %15 = sbr.rel (0) target = $region5
    $region4: #{tpu_custom_call.1} parent=1 // pred_region
      %s17 = ssub.s32 2048, 128
      %18 = vsyncadd [#allocation4], %s17
      %s19 = sshll.u32 [#allocation3], 4
      %s20 = int_to_ptr.vmem [resolvable:$true] %s19
      %25 = dma.hbm_to_vmem [thread:$0]  %s0, 128, %s20, [#allocation4], 128, 128, 8
    $region5: #{tpu_custom_call.1} parent=1 // pred_fallthru
      _
    // Predicated region
    $region6: #{tpu_custom_call.1} parent=1 // pred_check
      _
    $region7: #{tpu_custom_call.1} parent=1 // pred_check_branch
      %27 = sbr.rel (0) target = $region9
    $region8: #{tpu_custom_call.1} parent=1 // pred_region
      %s29 = ssub.s32 256, 256
      %30 = vsyncadd [#allocation7], %s29
      %s31 = sshll.u32 [#allocation6], 4
      %s32 = int_to_ptr.vmem [resolvable:$true] %s31
      %37 = dma.hbm_to_vmem [thread:$0]  %s1, 256, %s32, [#allocation7], 64, 64, 4
    $region9: #{tpu_custom_call.1} parent=1 // pred_fallthru
      _
    // Predicated region
    $region10: #{tpu_custom_call.1} parent=1 // pred_check
      _
    $region11: #{tpu_custom_call.1} parent=1 // pred_check_branch
      %39 = sbr.rel (0) target = $region13
    $region12: #{tpu_custom_call.1} parent=1 // pred_region
      _
    $region13: #{tpu_custom_call.1} parent=1 // pred_fallthru
      _
    // Predicated region
    $region14: #{tpu_custom_call.1} parent=1 // pred_check
      _
    $region15: #{tpu_custom_call.1} parent=1 // pred_check_branch
      %41 = sbr.rel (0) target = $region17
    $region16: #{tpu_custom_call.1} parent=1 // pred_region
      _
    $region17: #{tpu_custom_call.1} parent=1 // pred_fallthru
      _
    // Predicated region
    $region18: #{tpu_custom_call.1} parent=1 // pred_check
      _
    $region19: #{tpu_custom_call.1} parent=1 // pred_check_branch
      %43 = sbr.rel (0) target = $region21
    $region20: #{tpu_custom_call.1} parent=1 // pred_region
      _
    $region21: #{tpu_custom_call.1} parent=1 // pred_fallthru
      _
    // Predicated region
    $region22: #{tpu_custom_call.1} parent=1 // pred_check
      _
    $region23: #{tpu_custom_call.1} parent=1 // pred_check_branch
      %45 = sbr.rel (0) target = $region25
    $region24: #{tpu_custom_call.1} parent=1 // pred_region
      %46 = dma.done [#allocation4], 2048
    $region25: #{tpu_custom_call.1} parent=1 // pred_fallthru
      _
    // Predicated region
    $region26: #{tpu_custom_call.1} parent=1 // pred_check
      _
    $region27: #{tpu_custom_call.1} parent=1 // pred_check_branch
      %48 = sbr.rel (0) target = $region29
    $region28: #{tpu_custom_call.1} parent=1 // pred_region
      %49 = dma.done [#allocation7], 256
    $region29: #{tpu_custom_call.1} parent=1 // pred_fallthru
      _
    %v51 = vld [vmem:[#allocation3] sm:$0xff]
    %v52 = vld [vmem:[#allocation3 + $0x8] sm:$0xff]
    %v53 = vld [vmem:[#allocation3 + $0x10] sm:$0xff]
    %v54 = vld [vmem:[#allocation3 + $0x18] sm:$0xff]
    %v55 = vld [vmem:[#allocation3 + $0x20] sm:$0xff]
    %v56 = vld [vmem:[#allocation3 + $0x28] sm:$0xff]
    %v57 = vld [vmem:[#allocation3 + $0x30] sm:$0xff]
    %v58 = vld [vmem:[#allocation3 + $0x38] sm:$0xff]
    %v59 = vld [vmem:[#allocation3 + $0x40] sm:$0xff]
    %v60 = vld [vmem:[#allocation3 + $0x48] sm:$0xff]
    %v61 = vld [vmem:[#allocation3 + $0x50] sm:$0xff]
    %v62 = vld [vmem:[#allocation3 + $0x58] sm:$0xff]
    %v63 = vld [vmem:[#allocation3 + $0x60] sm:$0xff]
    %v64 = vld [vmem:[#allocation3 + $0x68] sm:$0xff]
    %v65 = vld [vmem:[#allocation3 + $0x70] sm:$0xff]
    %v66 = vld [vmem:[#allocation3 + $0x78] sm:$0xff]
    %v67 = vpack.c.bf16 %v52, %v51
    %v68 = vpack.c.bf16 %v54, %v53
    %v69 = vpack.c.bf16 %v56, %v55
    %v70 = vpack.c.bf16 %v58, %v57
    %v71 = vpack.c.bf16 %v60, %v59
    %v72 = vpack.c.bf16 %v62, %v61
    %v73 = vpack.c.bf16 %v64, %v63
    %v74 = vpack.c.bf16 %v66, %v65
    %v75 = vld [vmem:[#allocation6] sm:$0xf]
    %v76 = vld [vmem:[#allocation6 + $0x4] sm:$0xf]
    %v77 = vld [vmem:[#allocation6 + $0x8] sm:$0xf]
    %v78 = vld [vmem:[#allocation6 + $0xc] sm:$0xf]
    %v79 = vld [vmem:[%s2] sm:$0x1]
    %v81 = vlaneseq
    %v82 = vshrl.u32 %v81, 7
    %v83 = vsub.s32 0, %v82
    %v84 = vrot.slane %v79, %v83
    %v90 = vunpack.c.l.b16 %v75
    %v91 = vunpack.c.l.b16 %v76
    %v92 = vunpack.c.l.b16 %v77
    %v93 = vunpack.c.l.b16 %v78
    %v94 = vpack.c.b16 %v91, %v90
    %v95 = vpack.c.b16 %v93, %v92
    %vm98 = vcmask 261120
    %v100 = vsel %vm98, %v67, 0
    %v103 = vsel %vm98, %v68, 0
    %v106 = vsel %vm98, %v69, 0
    %v109 = vsel %vm98, %v70, 0
    %v112 = vsel %vm98, %v71, 0
    %v115 = vsel %vm98, %v72, 0
    %v118 = vsel %vm98, %v73, 0
    %v121 = vsel %vm98, %v74, 0
    %123 = vmatprep.subr.bf16.mxu0 0
    %124 = vmatpush1.bf16.msra.mxu0 0
    %125 = vmatprep.subr.bf16.mxu0 0
    %126 = vmatpush1.bf16.msra.mxu0 0
    %127 = vmatprep.subr.bf16.mxu0 0
    %128 = vmatpush1.bf16.msra.mxu0 0
    %129 = vmatprep.subr.bf16.mxu0 0
    %130 = vmatpush1.bf16.msra.mxu0 0
    %131 = vmatprep.subr.bf16.mxu0 0
    %132 = vmatpush1.bf16.msra.mxu0 0
    %133 = vmatprep.subr.bf16.mxu0 0
    %134 = vmatpush1.bf16.msra.mxu0 0
    %135 = vmatprep.subr.bf16.mxu0 0
    %136 = vmatpush1.bf16.msra.mxu0 %v95
    %137 = vmatprep.subr.bf16.mxu0 0
    %138 = vmatpush1.bf16.msra.mxu0 %v94
    %139 = vmatprep.subr.bf16.mxu0 0
    %140 = vmatpush2.bf16.msra.mxu0 0
    %141 = vmatprep.subr.bf16.mxu0 0
    %142 = vmatpush2.bf16.msra.mxu0 0
    %143 = vmatprep.subr.bf16.mxu0 0
    %144 = vmatpush2.bf16.msra.mxu0 0
    %145 = vmatprep.subr.bf16.mxu0 0
    %146 = vmatpush2.bf16.msra.mxu0 0
    %147 = vmatprep.subr.bf16.mxu0 0
    %148 = vmatpush2.bf16.msra.mxu0 0
    %149 = vmatprep.subr.bf16.mxu0 0
    %150 = vmatpush2.bf16.msra.mxu0 0
    %151 = vmatprep.subr.bf16.mxu0 0
    %152 = vmatpush2.bf16.msra.mxu0 0
    %153 = vmatprep.subr.bf16.mxu0 0
    %154 = vmatpush2.bf16.msra.mxu0 0
    %155 = vmatprep.mubr.bf16.mxu0 0
    %156 = vmatmul.mubr.bf16.gmra.mxu0 %v100
    %v157 = vpop.f32.mrf.mxu0
    %v158 = vadd.f32 %v84, %v157
    %v159 = vpop.f32.mrf.mxu0
    %v160 = vpop.f32.mrf.mxu0
    %v161 = vadd.f32 %v84, %v160
    %v162 = vpop.f32.mrf.mxu0
    %163 = vmatprep.mubr.bf16.mxu0 0
    %164 = vmatmul.mubr.bf16.gmra.mxu0 %v103
    %v165 = vpop.f32.mrf.mxu0
    %v166 = vadd.f32 %v84, %v165
    %v167 = vpop.f32.mrf.mxu0
    %v168 = vpop.f32.mrf.mxu0
    %v169 = vadd.f32 %v84, %v168
    %v170 = vpop.f32.mrf.mxu0
    %171 = vmatprep.mubr.bf16.mxu0 0
    %172 = vmatmul.mubr.bf16.gmra.mxu0 %v106
    %v173 = vpop.f32.mrf.mxu0
    %v174 = vadd.f32 %v84, %v173
    %v175 = vpop.f32.mrf.mxu0
    %v176 = vpop.f32.mrf.mxu0
    %v177 = vadd.f32 %v84, %v176
    %v178 = vpop.f32.mrf.mxu0
    %179 = vmatprep.mubr.bf16.mxu0 0
    %180 = vmatmul.mubr.bf16.gmra.mxu0 %v109
    %v181 = vpop.f32.mrf.mxu0
    %v182 = vadd.f32 %v84, %v181
    %v183 = vpop.f32.mrf.mxu0
    %v184 = vpop.f32.mrf.mxu0
    %v185 = vadd.f32 %v84, %v184
    %v186 = vpop.f32.mrf.mxu0
    %187 = vmatprep.mubr.bf16.mxu0 0
    %188 = vmatmul.mubr.bf16.gmra.mxu0 %v112
    %v189 = vpop.f32.mrf.mxu0
    %v190 = vadd.f32 %v84, %v189
    %v191 = vpop.f32.mrf.mxu0
    %v192 = vpop.f32.mrf.mxu0
    %v193 = vadd.f32 %v84, %v192
    %v194 = vpop.f32.mrf.mxu0
    %195 = vmatprep.mubr.bf16.mxu0 0
    %196 = vmatmul.mubr.bf16.gmra.mxu0 %v115
    %v197 = vpop.f32.mrf.mxu0
    %v198 = vadd.f32 %v84, %v197
    %v199 = vpop.f32.mrf.mxu0
    %v200 = vpop.f32.mrf.mxu0
    %v201 = vadd.f32 %v84, %v200
    %v202 = vpop.f32.mrf.mxu0
    %203 = vmatprep.mubr.bf16.mxu0 0
    %204 = vmatmul.mubr.bf16.gmra.mxu0 %v118
    %v205 = vpop.f32.mrf.mxu0
    %v206 = vadd.f32 %v84, %v205
    %v207 = vpop.f32.mrf.mxu0
    %v208 = vpop.f32.mrf.mxu0
    %v209 = vadd.f32 %v84, %v208
    %v210 = vpop.f32.mrf.mxu0
    %211 = vmatprep.mubr.bf16.mxu0 0
    %212 = vmatmul.mubr.bf16.gmra.mxu0 %v121
    %v213 = vpop.f32.mrf.mxu0
    %v214 = vadd.f32 %v84, %v213
    %v215 = vpop.f32.mrf.mxu0
    %v216 = vpop.f32.mrf.mxu0
    %v217 = vadd.f32 %v84, %v216
    %v218 = vpop.f32.mrf.mxu0
    %219 = vdwg.mxu0
    %vm220 = vcmp.gt.f32.partialorder %v158, 0.0
    %vm221 = vcmp.gt.f32.partialorder %v161, 0.0
    %vm222 = vcmp.gt.f32.partialorder %v166, 0.0
    %vm223 = vcmp.gt.f32.partialorder %v169, 0.0
    %vm224 = vcmp.gt.f32.partialorder %v174, 0.0
    %vm225 = vcmp.gt.f32.partialorder %v177, 0.0
    %vm226 = vcmp.gt.f32.partialorder %v182, 0.0
    %vm227 = vcmp.gt.f32.partialorder %v185, 0.0
    %vm228 = vcmp.gt.f32.partialorder %v190, 0.0
    %vm229 = vcmp.gt.f32.partialorder %v193, 0.0
    %vm230 = vcmp.gt.f32.partialorder %v198, 0.0
    %vm231 = vcmp.gt.f32.partialorder %v201, 0.0
    %vm232 = vcmp.gt.f32.partialorder %v206, 0.0
    %vm233 = vcmp.gt.f32.partialorder %v209, 0.0
    %vm234 = vcmp.gt.f32.partialorder %v214, 0.0
    %vm235 = vcmp.gt.f32.partialorder %v217, 0.0
    %v236 = vmul.f32 %v158, 0.01
    %v237 = vmul.f32 %v161, 0.01
    %v238 = vmul.f32 %v166, 0.01
    %v239 = vmul.f32 %v169, 0.01
    %v240 = vmul.f32 %v174, 0.01
    %v241 = vmul.f32 %v177, 0.01
    %v242 = vmul.f32 %v182, 0.01
    %v243 = vmul.f32 %v185, 0.01
    %v244 = vmul.f32 %v190, 0.01
    %v245 = vmul.f32 %v193, 0.01
    %v246 = vmul.f32 %v198, 0.01
    %v247 = vmul.f32 %v201, 0.01
    %v248 = vmul.f32 %v206, 0.01
    %v249 = vmul.f32 %v209, 0.01
    %v250 = vmul.f32 %v214, 0.01
    %v251 = vmul.f32 %v217, 0.01
    %v252 = vsel %vm220, %v158, %v236
    %v253 = vsel %vm221, %v161, %v237
    %v254 = vsel %vm222, %v166, %v238
    %v255 = vsel %vm223, %v169, %v239
    %v256 = vsel %vm224, %v174, %v240
    %v257 = vsel %vm225, %v177, %v241
    %v258 = vsel %vm226, %v182, %v242
    %v259 = vsel %vm227, %v185, %v243
    %v260 = vsel %vm228, %v190, %v244
    %v261 = vsel %vm229, %v193, %v245
    %v262 = vsel %vm230, %v198, %v246
    %v263 = vsel %vm231, %v201, %v247
    %v264 = vsel %vm232, %v206, %v248
    %v265 = vsel %vm233, %v209, %v249
    %v266 = vsel %vm234, %v214, %v250
    %v267 = vsel %vm235, %v217, %v251
    %v268 = vld [vmem:[%s3] sm:$0x1]
    %v269 = vpack.c.bf16 %v253, %v252
    %v270 = vpack.c.bf16 %v255, %v254
    %v271 = vpack.c.bf16 %v257, %v256
    %v272 = vpack.c.bf16 %v259, %v258
    %v273 = vpack.c.bf16 %v261, %v260
    %v274 = vpack.c.bf16 %v263, %v262
    %v275 = vpack.c.bf16 %v265, %v264
    %v276 = vpack.c.bf16 %v267, %v266
    %s277 = sld [smem:[#allocation2]]
    %v278 = vstv %s277
    %279 = vmatprep.subr.bf16.mxu0 0
    %280 = vmatpush1.bf16.xpose.msra.mxu0 %v276
    %281 = vmatprep.subr.bf16.mxu0 0
    %282 = vmatpush1.bf16.xpose.msra.mxu0 %v275
    %283 = vmatprep.subr.bf16.mxu0 0
    %284 = vmatpush1.bf16.xpose.msra.mxu0 %v274
    %285 = vmatprep.subr.bf16.mxu0 0
    %286 = vmatpush1.bf16.xpose.msra.mxu0 %v273
    %287 = vmatprep.subr.bf16.mxu0 0
    %288 = vmatpush1.bf16.xpose.msra.mxu0 %v272
    %289 = vmatprep.subr.bf16.mxu0 0
    %290 = vmatpush1.bf16.xpose.msra.mxu0 %v271
    %291 = vmatprep.subr.bf16.mxu0 0
    %292 = vmatpush1.bf16.xpose.msra.mxu0 %v270
    %293 = vmatprep.subr.bf16.mxu0 0
    %294 = vmatpush1.bf16.xpose.msra.mxu0 %v269
    %295 = vmatprep.subr.bf16.mxu0 0
    %296 = vmatpush2.bf16.xpose.msra.mxu0 0
    %297 = vmatprep.subr.bf16.mxu0 0
    %298 = vmatpush2.bf16.xpose.msra.mxu0 0
    %299 = vmatprep.subr.bf16.mxu0 0
    %300 = vmatpush2.bf16.xpose.msra.mxu0 0
    %301 = vmatprep.subr.bf16.mxu0 0
    %302 = vmatpush2.bf16.xpose.msra.mxu0 0
    %303 = vmatprep.subr.bf16.mxu0 0
    %304 = vmatpush2.bf16.xpose.msra.mxu0 0
    %305 = vmatprep.subr.bf16.mxu0 0
    %306 = vmatpush2.bf16.xpose.msra.mxu0 0
    %307 = vmatprep.subr.bf16.mxu0 0
    %308 = vmatpush2.bf16.xpose.msra.mxu0 0
    %309 = vmatprep.subr.bf16.mxu0 0
    %310 = vmatpush2.bf16.xpose.msra.mxu0 0
    %311 = vmatprep.mubr.bf16.mxu0 0
    %312 = vmatmul.mubr.bf16.gmra.mxu0 %v268
    %v313 = vpop.f32.mrf.mxu0
    %v314 = vadd.f32 %v278, %v313
    %v315 = vpop.f32.mrf.mxu0
    %v316 = vpop.f32.mrf.mxu0
    %v317 = vpop.f32.mrf.mxu0
    %318 = vdwg.mxu0
    %319 = vst [vmem:[#allocation8] sm:$0x1] %v314
    // Predicated region
    $region30: #{tpu_custom_call.1} parent=1 // pred_check
      _
    $region31: #{tpu_custom_call.1} parent=1 // pred_check_branch
      %321 = sbr.rel (0) target = $region33
    $region32: #{tpu_custom_call.1} parent=1 // pred_region
      %s323 = ssub.s32 16, 16
      %324 = vsyncadd [#allocation5], %s323
      %s326 = sshll.u32 [#allocation8], 4
      %s327 = int_to_ptr.vmem [resolvable:$true] %s326
      %329 = dma.vmem_to_hbm [thread:$0]  %s327, 16, %s5, [#allocation5]
    $region33: #{tpu_custom_call.1} parent=1 // pred_fallthru
      _
    // Predicated region
    $region34: #{tpu_custom_call.1} parent=1 // pred_check
      _
    $region35: #{tpu_custom_call.1} parent=1 // pred_check_branch
      %331 = sbr.rel (0) target = $region37
    $region36: #{tpu_custom_call.1} parent=1 // pred_region
      %332 = dma.done [#allocation5], 16
    $region37: #{tpu_custom_call.1} parent=1 // pred_fallthru
      _
    %333 = vsyncpa [#allocation4], 1
    %334 = vsyncpa [#allocation7], 1
    %335 = vsyncpa [#allocation5], 1

</llo_original>
